<compile_context>
chip_gen: v6e
topology: v6e:2x2x1
jax: 0.10.0
libtpu: 0.0.40
codegen_flags: <defaults>
</compile_context>

<pallas_src>
import functools

import jax
import jax.numpy as jnp
from jax.experimental import pallas as pl
from jax.experimental.pallas import tpu as pltpu


def _round_up(x, m):
    return ((x + m - 1) // m) * m


def _swiglu_kernel(x_ref, wgu_ref, wd_ref, o_ref, acc_ref, *, ti):
    """Grid point (i, j): row block i, intermediate block j.

    x_ref   : [tm, H]       activation row tile (resident across the I axis)
    wgu_ref : [H, 2*ti]     interleaved [Wg_tile_j | Wu_tile_j]
    wd_ref  : [ti, H]       down-projection row tile j
    o_ref   : [tm, H]       output row tile (written at last j)
    acc_ref : [tm, H] f32   down-projection accumulator
    """
    j = pl.program_id(1)

    @pl.when(j == 0)
    def _():
        acc_ref[...] = jnp.zeros_like(acc_ref)

    x = x_ref[...]                                                       # [tm, H]
    # One fused MXU matmul for gate + up (single weight stream, wide N).
    gu = jnp.dot(x, wgu_ref[...], preferred_element_type=jnp.float32)    # [tm, 2*ti]
    g = gu[:, :ti]
    u = gu[:, ti:]
    h = (g * jax.nn.sigmoid(g)) * u                                      # SiLU(g) * u, f32 (EUP sigmoid)

    # Partial down projection, accumulated in f32. h is cast back to the activation
    # dtype to feed the MXU natively (standard SwiGLU practice for bf16); for f32
    # activations this cast is a no-op.
    acc_ref[...] += jnp.dot(h.astype(x_ref.dtype), wd_ref[...],
                            preferred_element_type=jnp.float32)

    @pl.when(j == pl.num_programs(1) - 1)
    def _():
        o_ref[...] = acc_ref[...].astype(o_ref.dtype)


@functools.partial(jax.jit, static_argnames=("row_tile", "inter_tile"))
def point_wise_gated_projection(x, wg_t, wu_t, wd_t, *, row_tile=256, inter_tile=512):
    """
    x    : [..., H]
    wg_t : [H, I]  (gate_projection.weight.T)
    wu_t : [H, I]  (up_projection.weight.T)
    wd_t : [I, H]  (down_projection.weight.T)
    returns [..., H]
    """
    orig_shape = x.shape
    H = orig_shape[-1]
    I = wg_t.shape[1]

    x2 = x.reshape(-1, H)
    M = x2.shape[0]

    # Row tile: large enough to feed the MXU, sublane-aligned (16 for bf16, 8 for f32),
    # padded when M is not a multiple of the tile.
    sub = 16 if x.dtype == jnp.bfloat16 else 8
    tm = min(row_tile, _round_up(M, sub))
    tm = _round_up(tm, sub)
    Mp = _round_up(M, tm)
    if Mp != M:
        x2 = jnp.pad(x2, ((0, Mp - M), (0, 0)))

    # Intermediate tile: largest 128-multiple <= inter_tile that divides I
    # (falls back to the full I for tiny/odd configs, which is always legal since
    # the block then spans the whole axis).
    ti = I
    if I % 128 == 0:
        cand = max(128, (min(inter_tile, I) // 128) * 128)
        while cand >= 128:
            if I % cand == 0:
                ti = cand
                break
            cand -= 128
    n_i = I // ti

    # Interleave gate/up column tiles so grid step j streams one [H, 2*ti] block
    # [Wg_j | Wu_j] and a single matmul computes both projections.
    # (For a real model with constant weights this concat is precomputed once.)
    wgu = jnp.concatenate(
        [wg_t.reshape(H, n_i, ti), wu_t.reshape(H, n_i, ti)], axis=-1
    ).reshape(H, 2 * I)

    n_row_blocks = Mp // tm
    itemsize_x = jnp.dtype(x.dtype).itemsize
    itemsize_w = jnp.dtype(wg_t.dtype).itemsize
    cost = pl.CostEstimate(
        flops=2 * Mp * 3 * H * I,                        # gate + up + down matmuls
        transcendentals=Mp * I,                          # sigmoid in SiLU
        bytes_accessed=(2 * Mp * H * itemsize_x          # x in + out
                        + 3 * H * I * itemsize_w * n_row_blocks),  # weights re-streamed per row block
    )

    kernel = functools.partial(_swiglu_kernel, ti=ti)

    out = pl.pallas_call(
        kernel,
        out_shape=jax.ShapeDtypeStruct((Mp, H), x.dtype),
        grid_spec=pltpu.PrefetchScalarGridSpec(
            num_scalar_prefetch=0,
            grid=(n_row_blocks, n_i),
            in_specs=[
                pl.BlockSpec((tm, H), lambda i, j: (i, 0)),        # x row tile (constant over j)
                pl.BlockSpec((H, 2 * ti), lambda i, j: (0, j)),    # [Wg_j | Wu_j]
                pl.BlockSpec((ti, H), lambda i, j: (j, 0)),        # Wd row tile j
            ],
            out_specs=pl.BlockSpec((tm, H), lambda i, j: (i, 0)),  # resident across j
            scratch_shapes=[pltpu.VMEM((tm, H), jnp.float32)],     # f32 accumulator
        ),
        compiler_params=pltpu.CompilerParams(
            dimension_semantics=("parallel", "arbitrary"),
            vmem_limit_bytes=48 * 1024 * 1024,  # safe on v5e/v6e (128 MiB) and v7x (64 MiB)
        ),
        cost_estimate=cost,
    )(x2, wgu, wd_t)

    if Mp != M:
        out = out[:M]
    return out.reshape(orig_shape)


def _reference(x, wg_t, wu_t, wd_t):
    # Highest-precision reference so the comparison measures kernel correctness,
    # not XLA's default reduced-precision f32 matmul on TPU.
    hp = jax.lax.Precision.HIGHEST
    g = jnp.dot(x, wg_t, precision=hp)
    u = jnp.dot(x, wu_t, precision=hp)
    return jnp.dot(jax.nn.silu(g) * u, wd_t, precision=hp)


if __name__ == "__main__":
    # Synthetic "config": hidden_dim=128, intermediate_dim=256 (lane-dense H).
    # NOTE: the PyTorch module's forward uses config.intermediate_dim directly for all
    # three Linear layers (the 2/3-rounded value only affects reset_parameters' std),
    # so we parameterize on intermediate_dim directly.
    batch, seq = 2, 8
    hidden_dim = 128
    intermediate_dim = 256

    key = jax.random.PRNGKey(0)
    kx, kg, ku, kd = jax.random.split(key, 4)

    in_std = hidden_dim ** -0.5
    out_std = intermediate_dim ** -0.5

    x = jax.random.normal(kx, (batch, seq, hidden_dim), dtype=jnp.float32)
    # Deterministic truncated-normal init mirroring reset_parameters (pre-transposed).
    wg_t = (in_std * jax.random.truncated_normal(
        kg, -3.0, 3.0, (hidden_dim, intermediate_dim))).astype(jnp.float32)
    wu_t = (in_std * jax.random.truncated_normal(
        ku, -3.0, 3.0, (hidden_dim, intermediate_dim))).astype(jnp.float32)
    wd_t = (out_std * jax.random.truncated_normal(
        kd, -3.0, 3.0, (intermediate_dim, hidden_dim))).astype(jnp.float32)

    out = point_wise_gated_projection(x, wg_t, wu_t, wd_t)
    out = jax.block_until_ready(out)

    ref = _reference(x, wg_t, wu_t, wd_t)
    assert out.shape == (batch, seq, hidden_dim)
    assert jnp.allclose(out, ref, atol=2e-3, rtol=2e-3), "mismatch vs reference"

    print("KERNEL_OK")
</pallas_src>

<mosaic_0001>
module attributes {stable_mosaic.version = 11 : i64} {
  func.func @_swiglu_kernel(%arg0: i32, %arg1: i32, %arg2: memref<16x128xf32, #tpu.memory_space<vmem>>, %arg3: memref<128x512xf32, #tpu.memory_space<vmem>>, %arg4: memref<256x128xf32, #tpu.memory_space<vmem>>, %arg5: memref<16x128xf32, #tpu.memory_space<vmem>>, %arg6: memref<16x128xf32, #tpu.memory_space<vmem>>) attributes {dimension_semantics = [#tpu.dimension_semantics<parallel>, #tpu.dimension_semantics<arbitrary>], iteration_bounds = array<i64: 1, 1>, scalar_prefetch = 0 : i64, scratch_operands = 1 : i64, tpu.core_type = #tpu.core_type<tc>, window_params = [{transform_indices = @transform_0, window_bounds = array<i64: 16, 128>}, {transform_indices = @transform_1, window_bounds = array<i64: 128, 512>}, {transform_indices = @transform_2, window_bounds = array<i64: 256, 128>}, {transform_indices = @transform_3, window_bounds = array<i64: 16, 128>}]} {
    %c0_i32 = arith.constant 0 : i32
    %0 = arith.cmpi eq, %arg1, %c0_i32 : i32
    %1 = arith.extui %0 : i1 to i32
    %c0_i32_0 = arith.constant 0 : i32
    %2 = arith.cmpi ne, %1, %c0_i32_0 : i32
    scf.if %2 {
      %cst_14 = arith.constant 0.000000e+00 : f32
      %23 = vector.broadcast %cst_14 : f32 to vector<16x128xf32>
      %c0_15 = arith.constant 0 : index
      %c0_16 = arith.constant 0 : index
      %24 = vector.load %arg6[%c0_15, %c0_16] : memref<16x128xf32, #tpu.memory_space<vmem>>, vector<16x128xf32>
      tpu.vector_store %arg6[%c0_15, %c0_16], %23 {strides = array<i32>} : memref<16x128xf32, #tpu.memory_space<vmem>>, vector<16x128xf32>,
    } else {
    }
    %c0 = arith.constant 0 : index
    %c0_1 = arith.constant 0 : index
    %3 = vector.load %arg2[%c0, %c0_1] : memref<16x128xf32, #tpu.memory_space<vmem>>, vector<16x128xf32>
    %c0_2 = arith.constant 0 : index
    %c0_3 = arith.constant 0 : index
    %4 = vector.load %arg3[%c0_2, %c0_3] : memref<128x512xf32, #tpu.memory_space<vmem>>, vector<128x512xf32>
    %cst = arith.constant dense<0.000000e+00> : vector<16x512xf32>
    %5 = tpu.matmul %3, %4, %cst {dimension_numbers = #tpu.dot_dimension_numbers<[1], [0], [0], [1], [0, 0, 1, 1], [], []>} : vector<16x128xf32>, vector<128x512xf32>, vector<16x512xf32> -> vector<16x512xf32>
    %6 = vector.extract_strided_slice %5 {offsets = [0, 0], sizes = [16, 256], strides = [1, 1]} : vector<16x512xf32> to vector<16x256xf32>
    %7 = vector.extract_strided_slice %5 {offsets = [0, 256], sizes = [16, 256], strides = [1, 1]} : vector<16x512xf32> to vector<16x256xf32>
    %8 = arith.negf %6 : vector<16x256xf32>
    %9 = math.exp %8 : vector<16x256xf32>
    %cst_4 = arith.constant 1.000000e+00 : f32
    %10 = vector.broadcast %cst_4 : f32 to vector<16x256xf32>
    %11 = arith.addf %10, %9 : vector<16x256xf32>
    %12 = arith.divf %10, %11 : vector<16x256xf32>
    %13 = arith.mulf %6, %12 : vector<16x256xf32>
    %14 = arith.mulf %13, %7 : vector<16x256xf32>
    %c0_5 = arith.constant 0 : index
    %c0_6 = arith.constant 0 : index
    %15 = vector.load %arg6[%c0_5, %c0_6] : memref<16x128xf32, #tpu.memory_space<vmem>>, vector<16x128xf32>
    %c0_7 = arith.constant 0 : index
    %c0_8 = arith.constant 0 : index
    %16 = vector.load %arg4[%c0_7, %c0_8] : memref<256x128xf32, #tpu.memory_space<vmem>>, vector<256x128xf32>
    %cst_9 = arith.constant dense<0.000000e+00> : vector<16x128xf32>
    %17 = tpu.matmul %14, %16, %cst_9 {dimension_numbers = #tpu.dot_dimension_numbers<[1], [0], [0], [1], [0, 0, 1, 1], [], []>} : vector<16x256xf32>, vector<256x128xf32>, vector<16x128xf32> -> vector<16x128xf32>
    %18 = arith.addf %15, %17 : vector<16x128xf32>
    %c0_10 = arith.constant 0 : index
    %c0_11 = arith.constant 0 : index
    %19 = vector.load %arg6[%c0_10, %c0_11] : memref<16x128xf32, #tpu.memory_space<vmem>>, vector<16x128xf32>
    tpu.vector_store %arg6[%c0_10, %c0_11], %18 {strides = array<i32>} : memref<16x128xf32, #tpu.memory_space<vmem>>, vector<16x128xf32>,
    %c0_i32_12 = arith.constant 0 : i32
    %20 = arith.cmpi eq, %arg1, %c0_i32_12 : i32
    %21 = arith.extui %20 : i1 to i32
    %c0_i32_13 = arith.constant 0 : i32
    %22 = arith.cmpi ne, %21, %c0_i32_13 : i32
    scf.if %22 {
      %c0_14 = arith.constant 0 : index
      %c0_15 = arith.constant 0 : index
      %23 = vector.load %arg6[%c0_14, %c0_15] : memref<16x128xf32, #tpu.memory_space<vmem>>, vector<16x128xf32>
      %c0_16 = arith.constant 0 : index
      %c0_17 = arith.constant 0 : index
      %24 = vector.load %arg5[%c0_16, %c0_17] : memref<16x128xf32, #tpu.memory_space<vmem>>, vector<16x128xf32>
      tpu.vector_store %arg5[%c0_16, %c0_17], %23 {strides = array<i32>} : memref<16x128xf32, #tpu.memory_space<vmem>>, vector<16x128xf32>,
    } else {
    }
    return
  }
  func.func @transform_0(%arg0: i32, %arg1: i32) -> (i32, i32) {
    %c0_i32 = arith.constant 0 : i32
    %c0_i32_0 = arith.constant 0 : i32
    return %arg0, %c0_i32 : i32, i32
  }
  func.func @transform_1(%arg0: i32, %arg1: i32) -> (i32, i32) {
    %c0_i32 = arith.constant 0 : i32
    %c0_i32_0 = arith.constant 0 : i32
    return %c0_i32, %arg1 : i32, i32
  }
  func.func @transform_2(%arg0: i32, %arg1: i32) -> (i32, i32) {
    %c0_i32 = arith.constant 0 : i32
    %c0_i32_0 = arith.constant 0 : i32
    return %arg1, %c0_i32 : i32, i32
  }
  func.func @transform_3(%arg0: i32, %arg1: i32) -> (i32, i32) {
    %c0_i32 = arith.constant 0 : i32
    %c0_i32_0 = arith.constant 0 : i32
    return %arg0, %c0_i32 : i32, i32
  }
}

</mosaic_0001>

<llo_original>
// kernel: point_wise_gated_projection.1
$region0: #{point_wise_gated_projection.1}
  #allocation0 [shape = 'u32[]', space=smem, size = 0x4, offset = 0x4, fixed_abs, tag = 'smem constant byte address 0x4 - core index']
  #allocation1 [shape = 'u32[144,128]{1,0:T(1,128)}', space=vmem, size = 0x12000, scoped, tag = 'internal scratch']
  #allocation2 [shape = 'f32[16,128]{1,0:T(8,128)}', space=vmem, size = 0x2000, scoped, tag = 'scratch operand']
  %s0 = inlined_call_operand.vmem [shape: f32[16,128], index: 0, kind: input, shape index: {}]
  %s1 = inlined_call_operand.vmem [shape: f32[128,512], index: 1, kind: input, shape index: {}]
  %s2 = inlined_call_operand.vmem [shape: f32[256,128], index: 2, kind: input, shape index: {}]
  %s3 = inlined_call_operand.hbm [shape: f32[16,128], index: 3, kind: output, shape index: {}]
  %s4 = sld [smem:[#allocation0]]
  $region30: #{point_wise_gated_projection.1} parent=0
    _
  %s6 = ssub.s32 1, %s4
  %s7 = scalar_select 0, %s6, %s4
  $region1: #{point_wise_gated_projection.1} parent=0
    #allocation3 [shape = 'u8[8192]{0}', space=vmem, size = 0x2000, scoped, tag = 'output window, operand 0, single buffered']
    #allocation4 [shape = 's32[1]{0}', space=sflag, size = 0x4, scoped, tag = 'scoped memory for point_wise_gated_projection.1']
    %8 = vsyncpa [#allocation4], 0
    // Predicated region
    $region2: #{point_wise_gated_projection.1} parent=1 // pred_check
      _
    $region3: #{point_wise_gated_projection.1} parent=1 // pred_check_branch
      %10 = sbr.rel (0) target = $region5
    $region4: #{point_wise_gated_projection.1} parent=1 // pred_region
      _
    $region5: #{point_wise_gated_projection.1} parent=1 // pred_fallthru
      _
    // Predicated region
    $region6: #{point_wise_gated_projection.1} parent=1 // pred_check
      _
    $region7: #{point_wise_gated_projection.1} parent=1 // pred_check_branch
      %12 = sbr.rel (0) target = $region9
    $region8: #{point_wise_gated_projection.1} parent=1 // pred_region
      _
    $region9: #{point_wise_gated_projection.1} parent=1 // pred_fallthru
      _
    // Predicated region
    $region10: #{point_wise_gated_projection.1} parent=1 // pred_check
      _
    $region11: #{point_wise_gated_projection.1} parent=1 // pred_check_branch
      %14 = sbr.rel (0) target = $region13
    $region12: #{point_wise_gated_projection.1} parent=1 // pred_region
      _
    $region13: #{point_wise_gated_projection.1} parent=1 // pred_fallthru
      _
    %p15 = scmp.eq.s32.totalorder 0, 0
    // Predicated region
    $region14: #{point_wise_gated_projection.1} parent=1 // pred_check
      %p16 = pneg %p15
    $region15: #{point_wise_gated_projection.1} parent=1 // pred_check_branch
      %18 = sbr.rel (%p16) target = $region17
    $region16: #{point_wise_gated_projection.1} parent=1 // pred_region
      %19 = vst [vmem:[#allocation2] sm:$0xff] 0.0
      %20 = vst [vmem:[#allocation2 + $0x8] sm:$0xff] 0.0
    $region17: #{point_wise_gated_projection.1} parent=1 // pred_fallthru
      _
    %v21 = vld [vmem:[%s0] sm:$0xff]
    %v22 = vld [vmem:[%s0 + $0x8] sm:$0xff]
    %v23 = vld [vmem:[%s1] sm:$0xff]
    %v24 = vld [vmem:[%s1 + $0x8] sm:$0xff]
    %v25 = vld [vmem:[%s1 + $0x10] sm:$0xff]
    %v26 = vld [vmem:[%s1 + $0x18] sm:$0xff]
    %v27 = vld [vmem:[%s1 + $0x20] sm:$0xff]
    %v28 = vld [vmem:[%s1 + $0x28] sm:$0xff]
    %v29 = vld [vmem:[%s1 + $0x30] sm:$0xff]
    %v30 = vld [vmem:[%s1 + $0x38] sm:$0xff]
    %v31 = vld [vmem:[%s1 + $0x40] sm:$0xff]
    %v32 = vld [vmem:[%s1 + $0x48] sm:$0xff]
    %v33 = vld [vmem:[%s1 + $0x50] sm:$0xff]
    %v34 = vld [vmem:[%s1 + $0x58] sm:$0xff]
    %v35 = vld [vmem:[%s1 + $0x60] sm:$0xff]
    %v36 = vld [vmem:[%s1 + $0x68] sm:$0xff]
    %v37 = vld [vmem:[%s1 + $0x70] sm:$0xff]
    %v38 = vld [vmem:[%s1 + $0x78] sm:$0xff]
    %v39 = vld [vmem:[%s1 + $0x80] sm:$0xff]
    %v40 = vld [vmem:[%s1 + $0x88] sm:$0xff]
    %v41 = vld [vmem:[%s1 + $0x90] sm:$0xff]
    %v42 = vld [vmem:[%s1 + $0x98] sm:$0xff]
    %v43 = vld [vmem:[%s1 + $0xa0] sm:$0xff]
    %v44 = vld [vmem:[%s1 + $0xa8] sm:$0xff]
    %v45 = vld [vmem:[%s1 + $0xb0] sm:$0xff]
    %v46 = vld [vmem:[%s1 + $0xb8] sm:$0xff]
    %v47 = vld [vmem:[%s1 + $0xc0] sm:$0xff]
    %v48 = vld [vmem:[%s1 + $0xc8] sm:$0xff]
    %v49 = vld [vmem:[%s1 + $0xd0] sm:$0xff]
    %v50 = vld [vmem:[%s1 + $0xd8] sm:$0xff]
    %v51 = vld [vmem:[%s1 + $0xe0] sm:$0xff]
    %v52 = vld [vmem:[%s1 + $0xe8] sm:$0xff]
    %v53 = vld [vmem:[%s1 + $0xf0] sm:$0xff]
    %v54 = vld [vmem:[%s1 + $0xf8] sm:$0xff]
    %v55 = vld [vmem:[%s1 + $0x100] sm:$0xff]
    %v56 = vld [vmem:[%s1 + $0x108] sm:$0xff]
    %v57 = vld [vmem:[%s1 + $0x110] sm:$0xff]
    %v58 = vld [vmem:[%s1 + $0x118] sm:$0xff]
    %v59 = vld [vmem:[%s1 + $0x120] sm:$0xff]
    %v60 = vld [vmem:[%s1 + $0x128] sm:$0xff]
    %v61 = vld [vmem:[%s1 + $0x130] sm:$0xff]
    %v62 = vld [vmem:[%s1 + $0x138] sm:$0xff]
    %v63 = vld [vmem:[%s1 + $0x140] sm:$0xff]
    %v64 = vld [vmem:[%s1 + $0x148] sm:$0xff]
    %v65 = vld [vmem:[%s1 + $0x150] sm:$0xff]
    %v66 = vld [vmem:[%s1 + $0x158] sm:$0xff]
    %v67 = vld [vmem:[%s1 + $0x160] sm:$0xff]
    %v68 = vld [vmem:[%s1 + $0x168] sm:$0xff]
    %v69 = vld [vmem:[%s1 + $0x170] sm:$0xff]
    %v70 = vld [vmem:[%s1 + $0x178] sm:$0xff]
    %v71 = vld [vmem:[%s1 + $0x180] sm:$0xff]
    %v72 = vld [vmem:[%s1 + $0x188] sm:$0xff]
    %v73 = vld [vmem:[%s1 + $0x190] sm:$0xff]
    %v74 = vld [vmem:[%s1 + $0x198] sm:$0xff]
    %v75 = vld [vmem:[%s1 + $0x1a0] sm:$0xff]
    %v76 = vld [vmem:[%s1 + $0x1a8] sm:$0xff]
    %v77 = vld [vmem:[%s1 + $0x1b0] sm:$0xff]
    %v78 = vld [vmem:[%s1 + $0x1b8] sm:$0xff]
    %v79 = vld [vmem:[%s1 + $0x1c0] sm:$0xff]
    %v80 = vld [vmem:[%s1 + $0x1c8] sm:$0xff]
    %v81 = vld [vmem:[%s1 + $0x1d0] sm:$0xff]
    %v82 = vld [vmem:[%s1 + $0x1d8] sm:$0xff]
    %v83 = vld [vmem:[%s1 + $0x1e0] sm:$0xff]
    %v84 = vld [vmem:[%s1 + $0x1e8] sm:$0xff]
    %v85 = vld [vmem:[%s1 + $0x1f0] sm:$0xff]
    %v86 = vld [vmem:[%s1 + $0x1f8] sm:$0xff]
    %87 = vmatprep.subr.mxu0 %v84
    %88 = vmatpush1.msra.mxu0 %v83
    %89 = vmatprep.subr.mxu0 %v80
    %90 = vmatpush1.msra.mxu0 %v79
    %91 = vmatprep.subr.mxu0 %v76
    %92 = vmatpush1.msra.mxu0 %v75
    %93 = vmatprep.subr.mxu0 %v72
    %94 = vmatpush1.msra.mxu0 %v71
    %95 = vmatprep.subr.mxu0 %v68
    %96 = vmatpush1.msra.mxu0 %v67
    %97 = vmatprep.subr.mxu0 %v64
    %98 = vmatpush1.msra.mxu0 %v63
    %99 = vmatprep.subr.mxu0 %v60
    %100 = vmatpush1.msra.mxu0 %v59
    %101 = vmatprep.subr.mxu0 %v56
    %102 = vmatpush1.msra.mxu0 %v55
    %103 = vmatprep.subr.mxu0 %v52
    %104 = vmatpush1.msra.mxu0 %v51
    %105 = vmatprep.subr.mxu0 %v48
    %106 = vmatpush1.msra.mxu0 %v47
    %107 = vmatprep.subr.mxu0 %v44
    %108 = vmatpush1.msra.mxu0 %v43
    %109 = vmatprep.subr.mxu0 %v40
    %110 = vmatpush1.msra.mxu0 %v39
    %111 = vmatprep.subr.mxu0 %v36
    %112 = vmatpush1.msra.mxu0 %v35
    %113 = vmatprep.subr.mxu0 %v32
    %114 = vmatpush1.msra.mxu0 %v31
    %115 = vmatprep.subr.mxu0 %v28
    %116 = vmatpush1.msra.mxu0 %v27
    %117 = vmatprep.subr.mxu0 %v24
    %118 = vmatpush1.msra.mxu0 %v23
    %119 = vmatprep.subr.mxu0 0.0
    %120 = vmatpush2.msra.mxu0 0.0
    %121 = vmatprep.subr.mxu0 0.0
    %122 = vmatpush2.msra.mxu0 0.0
    %123 = vmatprep.subr.mxu0 0.0
    %124 = vmatpush2.msra.mxu0 0.0
    %125 = vmatprep.subr.mxu0 0.0
    %126 = vmatpush2.msra.mxu0 0.0
    %127 = vmatprep.subr.mxu0 0.0
    %128 = vmatpush2.msra.mxu0 0.0
    %129 = vmatprep.subr.mxu0 0.0
    %130 = vmatpush2.msra.mxu0 0.0
    %131 = vmatprep.subr.mxu0 0.0
    %132 = vmatpush2.msra.mxu0 0.0
    %133 = vmatprep.subr.mxu0 0.0
    %134 = vmatpush2.msra.mxu0 0.0
    %135 = vmatprep.subr.mxu0 0.0
    %136 = vmatpush2.msra.mxu0 0.0
    %137 = vmatprep.subr.mxu0 0.0
    %138 = vmatpush2.msra.mxu0 0.0
    %139 = vmatprep.subr.mxu0 0.0
    %140 = vmatpush2.msra.mxu0 0.0
    %141 = vmatprep.subr.mxu0 0.0
    %142 = vmatpush2.msra.mxu0 0.0
    %143 = vmatprep.subr.mxu0 0.0
    %144 = vmatpush2.msra.mxu0 0.0
    %145 = vmatprep.subr.mxu0 0.0
    %146 = vmatpush2.msra.mxu0 0.0
    %147 = vmatprep.subr.mxu0 0.0
    %148 = vmatpush2.msra.mxu0 0.0
    %149 = vmatprep.subr.mxu0 0.0
    %150 = vmatpush2.msra.mxu0 0.0
    %151 = vmatprep.mubr.f32.mxu0 0.0
    %152 = vmatmul.mubr.f32.gmra.mxu0 %v21
    %v153 = vpop.f32.mrf.mxu0
    %v154 = vadd.f32 0.0, %v153
    %v155 = vpop.f32.mrf.mxu0
    %v156 = vadd.f32 0.0, %v155
    %157 = vmatprep.mubr.f32.mxu0 0.0
    %158 = vmatmul.mubr.f32.gmra.mxu0 %v22
    %v159 = vpop.f32.mrf.mxu0
    %v160 = vadd.f32 0.0, %v159
    %v161 = vpop.f32.mrf.mxu0
    %v162 = vadd.f32 0.0, %v161
    %163 = vdwg.mxu0
    %164 = vmatprep.subr.mxu0 %v86
    %165 = vmatpush1.msra.mxu0 %v85
    %166 = vmatprep.subr.mxu0 %v82
    %167 = vmatpush1.msra.mxu0 %v81
    %168 = vmatprep.subr.mxu0 %v78
    %169 = vmatpush1.msra.mxu0 %v77
    %170 = vmatprep.subr.mxu0 %v74
    %171 = vmatpush1.msra.mxu0 %v73
    %172 = vmatprep.subr.mxu0 %v70
    %173 = vmatpush1.msra.mxu0 %v69
    %174 = vmatprep.subr.mxu0 %v66
    %175 = vmatpush1.msra.mxu0 %v65
    %176 = vmatprep.subr.mxu0 %v62
    %177 = vmatpush1.msra.mxu0 %v61
    %178 = vmatprep.subr.mxu0 %v58
    %179 = vmatpush1.msra.mxu0 %v57
    %180 = vmatprep.subr.mxu0 %v54
    %181 = vmatpush1.msra.mxu0 %v53
    %182 = vmatprep.subr.mxu0 %v50
    %183 = vmatpush1.msra.mxu0 %v49
    %184 = vmatprep.subr.mxu0 %v46
    %185 = vmatpush1.msra.mxu0 %v45
    %186 = vmatprep.subr.mxu0 %v42
    %187 = vmatpush1.msra.mxu0 %v41
    %188 = vmatprep.subr.mxu0 %v38
    %189 = vmatpush1.msra.mxu0 %v37
    %190 = vmatprep.subr.mxu0 %v34
    %191 = vmatpush1.msra.mxu0 %v33
    %192 = vmatprep.subr.mxu0 %v30
    %193 = vmatpush1.msra.mxu0 %v29
    %194 = vmatprep.subr.mxu0 %v26
    %195 = vmatpush1.msra.mxu0 %v25
    %196 = vmatprep.subr.mxu0 0.0
    %197 = vmatpush2.msra.mxu0 0.0
    %198 = vmatprep.subr.mxu0 0.0
    %199 = vmatpush2.msra.mxu0 0.0
    %200 = vmatprep.subr.mxu0 0.0
    %201 = vmatpush2.msra.mxu0 0.0
    %202 = vmatprep.subr.mxu0 0.0
    %203 = vmatpush2.msra.mxu0 0.0
    %204 = vmatprep.subr.mxu0 0.0
    %205 = vmatpush2.msra.mxu0 0.0
    %206 = vmatprep.subr.mxu0 0.0
    %207 = vmatpush2.msra.mxu0 0.0
    %208 = vmatprep.subr.mxu0 0.0
    %209 = vmatpush2.msra.mxu0 0.0
    %210 = vmatprep.subr.mxu0 0.0
    %211 = vmatpush2.msra.mxu0 0.0
    %212 = vmatprep.subr.mxu0 0.0
    %213 = vmatpush2.msra.mxu0 0.0
    %214 = vmatprep.subr.mxu0 0.0
    %215 = vmatpush2.msra.mxu0 0.0
    %216 = vmatprep.subr.mxu0 0.0
    %217 = vmatpush2.msra.mxu0 0.0
    %218 = vmatprep.subr.mxu0 0.0
    %219 = vmatpush2.msra.mxu0 0.0
    %220 = vmatprep.subr.mxu0 0.0
    %221 = vmatpush2.msra.mxu0 0.0
    %222 = vmatprep.subr.mxu0 0.0
    %223 = vmatpush2.msra.mxu0 0.0
    %224 = vmatprep.subr.mxu0 0.0
    %225 = vmatpush2.msra.mxu0 0.0
    %226 = vmatprep.subr.mxu0 0.0
    %227 = vmatpush2.msra.mxu0 0.0
    %228 = vmatprep.mubr.f32.mxu0 0.0
    %229 = vmatmul.mubr.f32.gmra.mxu0 %v21
    %v230 = vpop.f32.mrf.mxu0
    %v231 = vadd.f32 0.0, %v230
    %v232 = vpop.f32.mrf.mxu0
    %v233 = vadd.f32 0.0, %v232
    %234 = vmatprep.mubr.f32.mxu0 0.0
    %235 = vmatmul.mubr.f32.gmra.mxu0 %v22
    %v236 = vpop.f32.mrf.mxu0
    %v237 = vadd.f32 0.0, %v236
    %v238 = vpop.f32.mrf.mxu0
    %v239 = vadd.f32 0.0, %v238
    %240 = vdwg.mxu0
    %v241 = vxor.u32 %v154, 2147483648
    %v242 = vxor.u32 %v156, 2147483648
    %v243 = vxor.u32 %v160, 2147483648
    %v244 = vxor.u32 %v162, 2147483648
    %v245 = vmul.f32 %v241, 1.442695
    %v246 = vpow.pop %v245
    %v247 = vmul.f32 %v242, 1.442695
    %v248 = vpow.pop %v247
    %v249 = vmul.f32 %v243, 1.442695
    %v250 = vpow.pop %v249
    %v251 = vmul.f32 %v244, 1.442695
    %v252 = vpow.pop %v251
    %v253 = vadd.f32 %v246, 1.0
    %v254 = vadd.f32 %v248, 1.0
    %v255 = vadd.f32 %v250, 1.0
    %v256 = vadd.f32 %v252, 1.0
    %v257 = vrcp.pop %v253
    %v258 = vmul.f32 1.0, %v257
    %v259 = vrcp.pop %v254
    %v260 = vmul.f32 1.0, %v259
    %v261 = vrcp.pop %v255
    %v262 = vmul.f32 1.0, %v261
    %v263 = vrcp.pop %v256
    %v264 = vmul.f32 1.0, %v263
    %v265 = vmul.f32 %v154, %v258
    %v266 = vmul.f32 %v156, %v260
    %v267 = vmul.f32 %v160, %v262
    %v268 = vmul.f32 %v162, %v264
    %v269 = vmul.f32 %v265, %v231
    %v270 = vmul.f32 %v266, %v233
    %v271 = vmul.f32 %v267, %v237
    %v272 = vmul.f32 %v268, %v239
    %v273 = vld [vmem:[#allocation2] sm:$0xff]
    %v274 = vld [vmem:[#allocation2 + $0x8] sm:$0xff]
    %v275 = vld [vmem:[%s2] sm:$0xff]
    %v276 = vld [vmem:[%s2 + $0x8] sm:$0xff]
    %v277 = vld [vmem:[%s2 + $0x10] sm:$0xff]
    %v278 = vld [vmem:[%s2 + $0x18] sm:$0xff]
    %v279 = vld [vmem:[%s2 + $0x20] sm:$0xff]
    %v280 = vld [vmem:[%s2 + $0x28] sm:$0xff]
    %v281 = vld [vmem:[%s2 + $0x30] sm:$0xff]
    %v282 = vld [vmem:[%s2 + $0x38] sm:$0xff]
    %v283 = vld [vmem:[%s2 + $0x40] sm:$0xff]
    %v284 = vld [vmem:[%s2 + $0x48] sm:$0xff]
    %v285 = vld [vmem:[%s2 + $0x50] sm:$0xff]
    %v286 = vld [vmem:[%s2 + $0x58] sm:$0xff]
    %v287 = vld [vmem:[%s2 + $0x60] sm:$0xff]
    %v288 = vld [vmem:[%s2 + $0x68] sm:$0xff]
    %v289 = vld [vmem:[%s2 + $0x70] sm:$0xff]
    %v290 = vld [vmem:[%s2 + $0x78] sm:$0xff]
    %v291 = vld [vmem:[%s2 + $0x80] sm:$0xff]
    %v292 = vld [vmem:[%s2 + $0x88] sm:$0xff]
    %v293 = vld [vmem:[%s2 + $0x90] sm:$0xff]
    %v294 = vld [vmem:[%s2 + $0x98] sm:$0xff]
    %v295 = vld [vmem:[%s2 + $0xa0] sm:$0xff]
    %v296 = vld [vmem:[%s2 + $0xa8] sm:$0xff]
    %v297 = vld [vmem:[%s2 + $0xb0] sm:$0xff]
    %v298 = vld [vmem:[%s2 + $0xb8] sm:$0xff]
    %v299 = vld [vmem:[%s2 + $0xc0] sm:$0xff]
    %v300 = vld [vmem:[%s2 + $0xc8] sm:$0xff]
    %v301 = vld [vmem:[%s2 + $0xd0] sm:$0xff]
    %v302 = vld [vmem:[%s2 + $0xd8] sm:$0xff]
    %v303 = vld [vmem:[%s2 + $0xe0] sm:$0xff]
    %v304 = vld [vmem:[%s2 + $0xe8] sm:$0xff]
    %v305 = vld [vmem:[%s2 + $0xf0] sm:$0xff]
    %v306 = vld [vmem:[%s2 + $0xf8] sm:$0xff]
    %307 = vmatprep.subr.mxu0 0.0
    %308 = vmatpush1.msra.mxu0 %v290
    %309 = vmatprep.subr.mxu0 0.0
    %310 = vmatpush1.msra.mxu0 %v289
    %311 = vmatprep.subr.mxu0 0.0
    %312 = vmatpush1.msra.mxu0 %v288
    %313 = vmatprep.subr.mxu0 0.0
    %314 = vmatpush1.msra.mxu0 %v287
    %315 = vmatprep.subr.mxu0 0.0
    %316 = vmatpush1.msra.mxu0 %v286
    %317 = vmatprep.subr.mxu0 0.0
    %318 = vmatpush1.msra.mxu0 %v285
    %319 = vmatprep.subr.mxu0 0.0
    %320 = vmatpush1.msra.mxu0 %v284
    %321 = vmatprep.subr.mxu0 0.0
    %322 = vmatpush1.msra.mxu0 %v283
    %323 = vmatprep.subr.mxu0 0.0
    %324 = vmatpush1.msra.mxu0 %v282
    %325 = vmatprep.subr.mxu0 0.0
    %326 = vmatpush1.msra.mxu0 %v281
    %327 = vmatprep.subr.mxu0 0.0
    %328 = vmatpush1.msra.mxu0 %v280
    %329 = vmatprep.subr.mxu0 0.0
    %330 = vmatpush1.msra.mxu0 %v279
    %331 = vmatprep.subr.mxu0 0.0
    %332 = vmatpush1.msra.mxu0 %v278
    %333 = vmatprep.subr.mxu0 0.0
    %334 = vmatpush1.msra.mxu0 %v277
    %335 = vmatprep.subr.mxu0 0.0
    %336 = vmatpush1.msra.mxu0 %v276
    %337 = vmatprep.subr.mxu0 0.0
    %338 = vmatpush1.msra.mxu0 %v275
    %339 = vmatprep.subr.mxu0 0.0
    %340 = vmatpush2.msra.mxu0 %v306
    %341 = vmatprep.subr.mxu0 0.0
    %342 = vmatpush2.msra.mxu0 %v305
    %343 = vmatprep.subr.mxu0 0.0
    %344 = vmatpush2.msra.mxu0 %v304
    %345 = vmatprep.subr.mxu0 0.0
    %346 = vmatpush2.msra.mxu0 %v303
    %347 = vmatprep.subr.mxu0 0.0
    %348 = vmatpush2.msra.mxu0 %v302
    %349 = vmatprep.subr.mxu0 0.0
    %350 = vmatpush2.msra.mxu0 %v301
    %351 = vmatprep.subr.mxu0 0.0
    %352 = vmatpush2.msra.mxu0 %v300
    %353 = vmatprep.subr.mxu0 0.0
    %354 = vmatpush2.msra.mxu0 %v299
    %355 = vmatprep.subr.mxu0 0.0
    %356 = vmatpush2.msra.mxu0 %v298
    %357 = vmatprep.subr.mxu0 0.0
    %358 = vmatpush2.msra.mxu0 %v297
    %359 = vmatprep.subr.mxu0 0.0
    %360 = vmatpush2.msra.mxu0 %v296
    %361 = vmatprep.subr.mxu0 0.0
    %362 = vmatpush2.msra.mxu0 %v295
    %363 = vmatprep.subr.mxu0 0.0
    %364 = vmatpush2.msra.mxu0 %v294
    %365 = vmatprep.subr.mxu0 0.0
    %366 = vmatpush2.msra.mxu0 %v293
    %367 = vmatprep.subr.mxu0 0.0
    %368 = vmatpush2.msra.mxu0 %v292
    %369 = vmatprep.subr.mxu0 0.0
    %370 = vmatpush2.msra.mxu0 %v291
    %371 = vmatprep.mubr.f32.mxu0 %v270
    %372 = vmatmul.mubr.f32.gmra.mxu0 %v269
    %v373 = vpop.f32.mrf.mxu0
    %v374 = vadd.f32 0.0, %v373
    %v375 = vpop.f32.mrf.mxu0
    %376 = vmatprep.mubr.f32.mxu0 %v272
    %377 = vmatmul.mubr.f32.gmra.mxu0 %v271
    %v378 = vpop.f32.mrf.mxu0
    %v379 = vadd.f32 0.0, %v378
    %v380 = vpop.f32.mrf.mxu0
    %381 = vdwg.mxu0
    %v382 = vadd.f32 %v273, %v374
    %v383 = vadd.f32 %v274, %v379
    %384 = vst [vmem:[#allocation2] sm:$0xff] %v382
    %385 = vst [vmem:[#allocation2 + $0x8] sm:$0xff] %v383
    // Predicated region
    $region18: #{point_wise_gated_projection.1} parent=1 // pred_check
      %p386 = pneg %p15
    $region19: #{point_wise_gated_projection.1} parent=1 // pred_check_branch
      %388 = sbr.rel (%p386) target = $region21
    $region20: #{point_wise_gated_projection.1} parent=1 // pred_region
      %v389 = vld [vmem:[#allocation2] sm:$0xff]
      %v390 = vld [vmem:[#allocation2 + $0x8] sm:$0xff]
      %391 = vst [vmem:[#allocation3] sm:$0xff] %v389
      %392 = vst [vmem:[#allocation3 + $0x8] sm:$0xff] %v390
    $region21: #{point_wise_gated_projection.1} parent=1 // pred_fallthru
      _
    // Predicated region
    $region22: #{point_wise_gated_projection.1} parent=1 // pred_check
      _
    $region23: #{point_wise_gated_projection.1} parent=1 // pred_check_branch
      %394 = sbr.rel (0) target = $region25
    $region24: #{point_wise_gated_projection.1} parent=1 // pred_region
      %s396 = ssub.s32 256, 256
      %397 = vsyncadd [#allocation4], %s396
      %s398 = sshll.u32 [#allocation3], 4
      %s399 = int_to_ptr.vmem [resolvable:$true] %s398
      %404 = dma.vmem_to_hbm [thread:$0]  %s399, 256, %s3, [#allocation4], 128, 128, 8
    $region25: #{point_wise_gated_projection.1} parent=1 // pred_fallthru
      _
    // Predicated region
    $region26: #{point_wise_gated_projection.1} parent=1 // pred_check
      _
    $region27: #{point_wise_gated_projection.1} parent=1 // pred_check_branch
      %406 = sbr.rel (0) target = $region29
    $region28: #{point_wise_gated_projection.1} parent=1 // pred_region
      %407 = dma.done [#allocation4], 256
    $region29: #{point_wise_gated_projection.1} parent=1 // pred_fallthru
      _
    %408 = vsyncpa [#allocation4], 1

</llo_original>
